<compile_context>
chip_gen: v7x
topology: tpu7x:2x2x1
jax: 0.10.0
libtpu: 0.0.40
codegen_flags: <defaults>
</compile_context>

<pallas_src>
import functools

import jax
import jax.numpy as jnp
from jax import lax
from jax.experimental import pallas as pl
from jax.experimental.pallas import tpu as pltpu


def _ce_rows_kernel(p_ref, t_ref, o_ref, *, n_rows):
    """One grid step = one tile of TM rows (flattened (batch, position) pairs).

    p_ref: (TM, C) logits tile in the input's native dtype
    t_ref: (TM, 1) int32 target indices
    o_ref: (TM, 1) float32 per-row loss = logsumexp(row) - row[target]
           (rows beyond n_rows are written as exactly 0.0)
    """
    logits = p_ref[...].astype(jnp.float32)             # (TM, C), f32 compute
    tgt = t_ref[...]                                     # (TM, 1) int32
    tm, c = logits.shape

    # numerically stable log-sum-exp over the class (lane) axis
    m = jnp.max(logits, axis=-1, keepdims=True)                              # (TM, 1)
    lse = m + jnp.log(jnp.sum(jnp.exp(logits - m), axis=-1, keepdims=True))  # (TM, 1)

    # gather logits[r, target[r]] via one-hot compare+select (no lane gather on TPU)
    col_ids = lax.broadcasted_iota(jnp.int32, (tm, c), 1)                    # (TM, C)
    picked = jnp.sum(jnp.where(col_ids == tgt, logits, 0.0),
                     axis=-1, keepdims=True)                                 # (TM, 1)

    loss = lse - picked                                                      # (TM, 1)

    # Zero out padded rows of the final (boundary) tile so the wrapper can sum
    # the whole padded output; select drops any NaN from out-of-bounds reads.
    row_ids = pl.program_id(0) * tm + lax.broadcasted_iota(jnp.int32, (tm, 1), 0)
    o_ref[...] = jnp.where(row_ids < n_rows, loss, 0.0)


def _round_up(x: int, m: int) -> int:
    return ((x + m - 1) // m) * m


def _choose_tm(n_rows: int, n_cls: int, itemsize: int) -> int:
    """Largest row tile (multiple of 8, <=1024) whose logits buffer stays ~8 MiB
    so that double-buffering fits scoped VMEM on all of v5e/v6e/v7x."""
    budget = 8 * 1024 * 1024                     # bytes per single logits buffer
    tm = budget // max(1, n_cls * itemsize)
    tm = max(8, min(1024, (tm // 8) * 8))
    tm = min(tm, _round_up(n_rows, 8))
    return tm


def cross_entropy_loss(predict: jax.Array, target: jax.Array) -> jax.Array:
    """predict: [B, T, C] float, target: [B, T] int -> scalar float32 loss."""
    B, T, C = predict.shape
    N = B * T

    # Flatten (B, T) -> rows; keep native dtype for the logits stream.
    logits = predict.reshape(N, C)
    tgt = target.astype(jnp.int32).reshape(N, 1)

    itemsize = jnp.dtype(predict.dtype).itemsize
    TM = _choose_tm(N, C, itemsize)
    G = pl.cdiv(N, TM)

    # VMEM budget: double-buffered logits + targets + per-row output, with headroom.
    tile_bytes = TM * C * itemsize + TM * 4 + TM * 4
    vmem_limit = min(max(4 * tile_bytes + (2 << 20), 32 << 20), 56 << 20)

    # TODO(synk): for very large vocabularies (C where even TM=8 blows VMEM),
    # add class-axis tiling with an online logsumexp; not needed for these shapes.

    kernel = functools.partial(_ce_rows_kernel, n_rows=N)

    out = pl.pallas_call(
        kernel,
        out_shape=jax.ShapeDtypeStruct((G * TM, 1), jnp.float32),
        grid_spec=pltpu.PrefetchScalarGridSpec(
            num_scalar_prefetch=0,
            grid=(G,),
            in_specs=[
                pl.BlockSpec((TM, C), lambda i: (i, 0)),
                pl.BlockSpec((TM, 1), lambda i: (i, 0)),
            ],
            out_specs=pl.BlockSpec((TM, 1), lambda i: (i, 0)),
        ),
        compiler_params=pltpu.CompilerParams(
            dimension_semantics=("parallel",),   # independent row tiles -> megacore OK
            vmem_limit_bytes=vmem_limit,
        ),
    )(logits, tgt)

    # Padded rows are exact 0.0, so summing the full padded output is safe.
    # mean over T per sample, summed over B, divided by B  ==  sum / (B*T)
    return jnp.sum(out) / jnp.float32(N)


def _reference_loss(predict, target):
    """Pure-JAX reference mirroring the PyTorch per-sample loop."""
    predict = predict.astype(jnp.float32)
    lse = jax.nn.logsumexp(predict, axis=-1)                                   # (B, T)
    picked = jnp.take_along_axis(
        predict, target[..., None].astype(jnp.int32), axis=-1)[..., 0]         # (B, T)
    per_sample = jnp.mean(lse - picked, axis=-1)                               # (B,)
    return jnp.sum(per_sample) / predict.shape[0]


if __name__ == "__main__":
    key = jax.random.PRNGKey(0)
    k1, k2 = jax.random.split(key)

    B, T, C = 2, 8, 16
    predict = jax.random.normal(k1, (B, T, C), dtype=jnp.float32)
    target = jax.random.randint(k2, (B, T), 0, C, dtype=jnp.int32)

    loss = cross_entropy_loss(predict, target)
    loss = jax.block_until_ready(loss)

    ref = _reference_loss(predict, target)
    assert jnp.allclose(loss, ref, rtol=1e-5, atol=1e-5), (loss, ref)

    print("KERNEL_OK")
</pallas_src>

<mosaic_0001>
module attributes {stable_mosaic.version = 11 : i64} {
  func.func @_ce_rows_kernel(%arg0: i32, %arg1: memref<16x16xf32, #tpu.memory_space<vmem>>, %arg2: memref<16x1xi32, #tpu.memory_space<vmem>>, %arg3: memref<16x1xf32, #tpu.memory_space<vmem>>) attributes {dimension_semantics = [#tpu.dimension_semantics<parallel>], iteration_bounds = array<i64: 1>, scalar_prefetch = 0 : i64, scratch_operands = 0 : i64, tpu.core_type = #tpu.core_type<tc>, window_params = [{transform_indices = @transform_0, window_bounds = array<i64: 16, 16>}, {transform_indices = @transform_1, window_bounds = array<i64: 16, 1>}, {transform_indices = @transform_2, window_bounds = array<i64: 16, 1>}]} {
    %c0 = arith.constant 0 : index
    %c0_0 = arith.constant 0 : index
    %0 = vector.load %arg1[%c0, %c0_0] : memref<16x16xf32, #tpu.memory_space<vmem>>, vector<16x16xf32>
    %c0_1 = arith.constant 0 : index
    %c0_2 = arith.constant 0 : index
    %1 = vector.load %arg2[%c0_1, %c0_2] : memref<16x1xi32, #tpu.memory_space<vmem>>, vector<16x1xi32>
    %cst = arith.constant dense<0xFF800000> : vector<16xf32>
    %2 = vector.multi_reduction <maximumf>, %0, %cst [1] : vector<16x16xf32> to vector<16xf32>
    %3 = vector.shape_cast %2 : vector<16xf32> to vector<16x1xf32>
    %4 = vector.broadcast %3 : vector<16x1xf32> to vector<16x16xf32>
    %5 = arith.subf %0, %4 : vector<16x16xf32>
    %6 = math.exp %5 : vector<16x16xf32>
    %cst_3 = arith.constant dense<0.000000e+00> : vector<16xf32>
    %7 = vector.multi_reduction <add>, %6, %cst_3 [1] : vector<16x16xf32> to vector<16xf32>
    %8 = vector.shape_cast %7 : vector<16xf32> to vector<16x1xf32>
    %9 = math.log %8 : vector<16x1xf32>
    %10 = arith.addf %3, %9 : vector<16x1xf32>
    %11 = tpu.iota {dimensions = array<i32: 1>} : vector<16x16xi32>
    %12 = vector.broadcast %1 : vector<16x1xi32> to vector<16x16xi32>
    %13 = arith.cmpi eq, %11, %12 : vector<16x16xi32>
    %cst_4 = arith.constant 0.000000e+00 : f32
    %14 = vector.broadcast %cst_4 : f32 to vector<16x16xf32>
    %15 = arith.select %13, %0, %14 : vector<16x16xi1>, vector<16x16xf32>
    %cst_5 = arith.constant dense<0.000000e+00> : vector<16xf32>
    %16 = vector.multi_reduction <add>, %15, %cst_5 [1] : vector<16x16xf32> to vector<16xf32>
    %17 = vector.shape_cast %16 : vector<16xf32> to vector<16x1xf32>
    %18 = arith.subf %10, %17 : vector<16x1xf32>
    %c16_i32 = arith.constant 16 : i32
    %19 = arith.muli %arg0, %c16_i32 : i32
    %20 = tpu.iota {dimensions = array<i32: 0>} : vector<16x1xi32>
    %21 = vector.broadcast %19 : i32 to vector<16x1xi32>
    %22 = arith.addi %21, %20 : vector<16x1xi32>
    %c16_i32_6 = arith.constant 16 : i32
    %23 = vector.broadcast %c16_i32_6 : i32 to vector<16x1xi32>
    %24 = arith.cmpi slt, %22, %23 : vector<16x1xi32>
    %cst_7 = arith.constant 0.000000e+00 : f32
    %25 = vector.broadcast %cst_7 : f32 to vector<16x1xf32>
    %26 = arith.select %24, %18, %25 : vector<16x1xi1>, vector<16x1xf32>
    %c0_8 = arith.constant 0 : index
    %c0_9 = arith.constant 0 : index
    %27 = vector.load %arg3[%c0_8, %c0_9] : memref<16x1xf32, #tpu.memory_space<vmem>>, vector<16x1xf32>
    tpu.vector_store %arg3[%c0_8, %c0_9], %26 {strides = array<i32>} : memref<16x1xf32, #tpu.memory_space<vmem>>, vector<16x1xf32>,
    return
  }
  func.func @transform_0(%arg0: i32) -> (i32, i32) {
    %c0_i32 = arith.constant 0 : i32
    %c0_i32_0 = arith.constant 0 : i32
    return %arg0, %c0_i32 : i32, i32
  }
  func.func @transform_1(%arg0: i32) -> (i32, i32) {
    %c0_i32 = arith.constant 0 : i32
    %c0_i32_0 = arith.constant 0 : i32
    return %arg0, %c0_i32 : i32, i32
  }
  func.func @transform_2(%arg0: i32) -> (i32, i32) {
    %c0_i32 = arith.constant 0 : i32
    %c0_i32_0 = arith.constant 0 : i32
    return %arg0, %c0_i32 : i32, i32
  }
}

</mosaic_0001>

<llo_original>
// kernel: tpu_custom_call.1
$region0: #{tpu_custom_call.1}
  #allocation0 [shape = 'u32[]', space=smem, size = 0x4, offset = 0x4, fixed_abs, tag = 'smem constant byte address 0x4 - core index']
  #allocation1 [shape = 'u32[144,128]{1,0:T(1,128)}', space=vmem, size = 0x12000, scoped, tag = 'internal scratch']
  %s0 = inlined_call_operand.vmem [shape: f32[16,16], index: 0, kind: input, shape index: {}]
  %s1 = inlined_call_operand.vmem [shape: s32[16,1], index: 1, kind: input, shape index: {}]
  %s2 = inlined_call_operand.vmem [shape: f32[16,1], index: 2, kind: output, shape index: {}]
  %s3 = sld [smem:[#allocation0]]
  $region18: #{tpu_custom_call.1} parent=0
    _
  %s5 = ssub.s32 1, %s3
  %s6 = scalar_select 0, %s5, %s3
  // Predicated region
  $region2: #{tpu_custom_call.1} parent=0 // pred_check
    _
  $region3: #{tpu_custom_call.1} parent=0 // pred_check_branch
    %8 = sbr.rel (0) target = $region5
  $region4: #{tpu_custom_call.1} parent=0 // pred_region
    _
  $region5: #{tpu_custom_call.1} parent=0 // pred_fallthru
    _
  // Predicated region
  $region6: #{tpu_custom_call.1} parent=0 // pred_check
    _
  $region7: #{tpu_custom_call.1} parent=0 // pred_check_branch
    %10 = sbr.rel (0) target = $region9
  $region8: #{tpu_custom_call.1} parent=0 // pred_region
    _
  $region9: #{tpu_custom_call.1} parent=0 // pred_fallthru
    _
  %v11 = vld [vmem:[%s0] sm:$0xff]
  %v12 = vld [vmem:[%s0 + $0x8] sm:$0xff]
  %v13 = vld [vmem:[%s1] sm:$0xff]
  %v14 = vld [vmem:[%s1 + $0x8] sm:$0xff]
  %vm15 = vcmask 130048
  %v16 = vsel %vm15, %v11, -inf
  %17 = vmax.xlane.f32.xlu0 %v16
  %v18 = vpop.xlane.xlu0 %17
  %v19 = vsel %vm15, %v12, -inf
  %20 = vmax.xlane.f32.xlu0 %v19
  %v21 = vpop.xlane.xlu0 %20
  %v22 = vsub.f32 %v11, %v18
  %v23 = vsub.f32 %v12, %v21
  %v24 = vmul.f32 %v22, 1.442695
  %v25 = vpow.pop %v24
  %v26 = vmul.f32 %v23, 1.442695
  %v27 = vpow.pop %v26
  %v28 = vsel %vm15, %v25, 0.0
  %29 = vadd.xlane.f32.xlu0 %v28
  %v30 = vpop.xlane.xlu0 %29
  %v31 = vsel %vm15, %v27, 0.0
  %32 = vadd.xlane.f32.xlu0 %v31
  %v33 = vpop.xlane.xlu0 %32
  %v34 = vlog2.pop %v30
  %v35 = vmul.f32 %v34, 0.6931472
  %v36 = vlog2.pop %v33
  %v37 = vmul.f32 %v36, 0.6931472
  %v38 = vadd.f32 %v18, %v35
  %v39 = vadd.f32 %v21, %v37
  %v40 = vlaneseq
  %v41 = vand.u32 %v40, 127
  %42 = vset.pattern.permute.xlu0 0
  %43 = vperm.xlu0 %42, %v13
  %v44 = vpop.permute.xlu0 %43
  %45 = vset.pattern.permute.xlu0 0
  %46 = vperm.xlu0 %45, %v14
  %v47 = vpop.permute.xlu0 %46
  %vm48 = vcmp.eq.s32.totalorder %v41, %v44
  %vm49 = vcmp.eq.s32.totalorder %v41, %v47
  %v50 = vsel %vm48, %v11, 0.0
  %v51 = vsel %vm49, %v12, 0.0
  %v52 = vsel %vm15, %v50, 0.0
  %53 = vadd.xlane.f32.xlu0 %v52
  %v54 = vpop.xlane.xlu0 %53
  %v55 = vsel %vm15, %v51, 0.0
  %56 = vadd.xlane.f32.xlu0 %v55
  %v57 = vpop.xlane.xlu0 %56
  %v58 = vsub.f32 %v38, %v54
  %v59 = vsub.f32 %v39, %v57
  %s60 = smul.u32 0, 16
  %v61 = vlaneseq
  %v62 = vshrl.u32 %v61, 7
  %v63 = vadd.s32 %v62, 8
  %v64 = vstv %s60
  %v65 = vadd.s32 %v64, %v62
  %v66 = vadd.s32 %v64, %v63
  %vm67 = vcmp.lt.s32.totalorder %v65, 16
  %vm68 = vcmp.lt.s32.totalorder %v66, 16
  %v69 = vsel %vm67, %v58, 0.0
  %v70 = vsel %vm68, %v59, 0.0
  %vm71 = vcmask 7168
  %72 = vst.msk [vmem:[%s2] sm:$0xff] %vm71, %v69
  %73 = vst.msk [vmem:[%s2 + $0x8] sm:$0xff] %vm71, %v70
  // Predicated region
  $region10: #{tpu_custom_call.1} parent=0 // pred_check
    _
  $region11: #{tpu_custom_call.1} parent=0 // pred_check_branch
    %75 = sbr.rel (0) target = $region13
  $region12: #{tpu_custom_call.1} parent=0 // pred_region
    _
  $region13: #{tpu_custom_call.1} parent=0 // pred_fallthru
    _
  // Predicated region
  $region14: #{tpu_custom_call.1} parent=0 // pred_check
    _
  $region15: #{tpu_custom_call.1} parent=0 // pred_check_branch
    %77 = sbr.rel (0) target = $region17
  $region16: #{tpu_custom_call.1} parent=0 // pred_region
    _
  $region17: #{tpu_custom_call.1} parent=0 // pred_fallthru
    _

</llo_original>
